<compile_context>
chip_gen: v6e
topology: v6e:2x2x1
jax: 0.10.0
libtpu: 0.0.40
codegen_flags: <defaults>
</compile_context>

<pallas_src>
import functools

import numpy as np
import jax
import jax.numpy as jnp
from jax.experimental import pallas as pl
from jax.experimental.pallas import tpu as pltpu


PAD_C = 128          # lane-dense padded class dimension
_NEG = -1e30         # bias padding value -> exp underflows to exactly 0.0


# ---------------------------------------------------------------------------
# Shared compute: two tiny linears (unrolled on the VPU) + lane-padded softmax
# ---------------------------------------------------------------------------
def _forward_block(x, w1, b1, w2p, b2p):
    """x: (B, 2), w1: (2, 5), b1: (1, 5), w2p: (5, 128), b2p: (1, 128).

    Returns probs of shape (B, 128); columns >= num_classes are exactly 0
    because their padded bias is -1e30 (exp underflow) and padded weights are 0.
    """
    in_f = w1.shape[0]   # 2
    hid = w2p.shape[0]   # 5

    # layer 1: (B,2) @ (2,5) + b1, unrolled broadcast-MACs
    h = b1
    for k in range(in_f):
        h = h + x[:, k:k + 1] * w1[k:k + 1, :]          # (B, 5)

    # layer 2: (B,5) @ (5,128-padded) + b2p, unrolled broadcast-MACs
    logits = b2p
    for k in range(hid):
        logits = logits + h[:, k:k + 1] * w2p[k:k + 1, :]   # (B, 128)

    # softmax over the lane axis; padded lanes contribute exp(-1e30 - m) == 0
    m = jnp.max(logits, axis=1, keepdims=True)
    e = jnp.exp(logits - m)
    denom = jnp.sum(e, axis=1, keepdims=True)
    return e * pl.reciprocal(denom, approx=True)        # (B, 128)


# ---------------------------------------------------------------------------
# Kernel 1: forward only (y is None) -> lane-dense (TILE_B, 128) probs slab
# ---------------------------------------------------------------------------
def net_forward_kernel(x_ref, w1_ref, b1_ref, w2_ref, b2_ref, out_ref):
    probs = _forward_block(x_ref[...], w1_ref[...], b1_ref[...],
                           w2_ref[...], b2_ref[...])
    out_ref[...] = probs.astype(out_ref.dtype)


# ---------------------------------------------------------------------------
# Kernel 2 (fused): forward + PyTorch-style cross_entropy(probs, y) -> SMEM
# ---------------------------------------------------------------------------
def net_fused_loss_kernel(x_ref, y_ref, w1_ref, b1_ref, w2_ref, b2_ref,
                          loss_ref, *, num_classes):
    probs = _forward_block(x_ref[...], w1_ref[...], b1_ref[...],
                           w2_ref[...], b2_ref[...])                 # (B, 128)
    batch = x_ref.shape[0]

    cls = jax.lax.broadcasted_iota(jnp.int32, probs.shape, 1)        # (B, 128)

    # logsumexp over the REAL classes only (mask padded lanes)
    pm = jnp.where(cls < num_classes, probs, _NEG)
    mp = jnp.max(pm, axis=1, keepdims=True)
    lse = jnp.log(jnp.sum(jnp.exp(pm - mp), axis=1, keepdims=True)) + mp  # (B,1)

    # picked[i] = probs[i, y[i]]  (y values are < num_classes, so padded lanes
    # never match)
    y = y_ref[...]                                                   # (B, 1) i32
    picked = jnp.sum(jnp.where(cls == y, probs, 0.0), axis=1, keepdims=True)

    per_row = lse - picked                                           # (B, 1)
    loss_ref[0, 0] = jnp.sum(per_row) * (1.0 / batch)


# ---------------------------------------------------------------------------
# Wrappers
# ---------------------------------------------------------------------------
def _pad_layer2(w2, b2):
    c = w2.shape[1]
    w2p = jnp.pad(w2, ((0, 0), (0, PAD_C - c)))                       # zeros
    b2p = jnp.pad(b2, ((0, 0), (0, PAD_C - c)), constant_values=_NEG)  # -1e30
    return w2p, b2p


def _pick_tile_b(batch):
    for t in (512, 256, 128, 64, 32, 16, 8):
        if batch % t == 0:
            return t
    return batch  # fallback: single full-batch block (always legal)


def net_forward(x, w1, b1, w2, b2):
    """x: (B, 2) f32. w1: (2,5), b1: (1,5), w2: (5,4), b2: (1,4). Returns (B, 4)."""
    B, in_f = x.shape
    hid = w2.shape[0]
    c = w2.shape[1]
    w2p, b2p = _pad_layer2(w2, b2)

    tile_b = _pick_tile_b(B)
    grid = (B // tile_b,)

    out = pl.pallas_call(
        net_forward_kernel,
        out_shape=jax.ShapeDtypeStruct((B, PAD_C), jnp.float32),
        grid=grid,
        in_specs=[
            pl.BlockSpec((tile_b, in_f), lambda i: (i, 0)),
            pl.BlockSpec((in_f, b1.shape[1]), lambda i: (0, 0)),
            pl.BlockSpec((1, b1.shape[1]), lambda i: (0, 0)),
            pl.BlockSpec((hid, PAD_C), lambda i: (0, 0)),
            pl.BlockSpec((1, PAD_C), lambda i: (0, 0)),
        ],
        out_specs=pl.BlockSpec((tile_b, PAD_C), lambda i: (i, 0)),
        compiler_params=pltpu.CompilerParams(
            dimension_semantics=("parallel",)),
    )(x, w1, b1, w2p, b2p)
    return out[:, :c]


def net_forward_with_loss(x, y, w1, b1, w2, b2):
    """Equivalent of Net.forward(x, y): returns scalar cross-entropy loss.

    Single fused pallas_call: forward + loss, scalar loss written to SMEM.
    # TODO(synk): if B grows large enough to need batch tiling here, switch to
    # per-tile partial sums (divide by true B, mask pad rows) instead of a
    # single whole-batch block.
    """
    c = w2.shape[1]
    w2p, b2p = _pad_layer2(w2, b2)
    vmem = pl.BlockSpec(memory_space=pltpu.MemorySpace.VMEM)
    smem = pl.BlockSpec(memory_space=pltpu.MemorySpace.SMEM)

    loss = pl.pallas_call(
        functools.partial(net_fused_loss_kernel, num_classes=c),
        out_shape=jax.ShapeDtypeStruct((1, 1), jnp.float32),
        in_specs=[vmem] * 6,
        out_specs=smem,
    )(x, y.reshape(-1, 1).astype(jnp.int32), w1, b1, w2p, b2p)
    return loss[0, 0]


# ---------------------------------------------------------------------------
# Deterministic parameter init (same shapes as nn.Linear(2,5), nn.Linear(5,4))
# ---------------------------------------------------------------------------
def init_params(key):
    k1, k2, k3, k4 = jax.random.split(key, 4)
    # PyTorch stores weights as (out, in); we pre-transpose to (in, out).
    w1 = jax.random.uniform(k1, (5, 2), jnp.float32, -0.5, 0.5).T      # (2, 5)
    b1 = jax.random.uniform(k2, (1, 5), jnp.float32, -0.5, 0.5)        # (1, 5)
    w2 = jax.random.uniform(k3, (4, 5), jnp.float32, -0.5, 0.5).T      # (5, 4)
    b2 = jax.random.uniform(k4, (1, 4), jnp.float32, -0.5, 0.5)        # (1, 4)
    return w1, b1, w2, b2


if __name__ == "__main__":
    key = jax.random.PRNGKey(0)
    kx, ky, kp = jax.random.split(key, 3)

    B = 8
    x = jax.random.normal(kx, (B, 2), dtype=jnp.float32)
    y = jax.random.randint(ky, (B,), 0, 4, dtype=jnp.int32)
    w1, b1, w2, b2 = init_params(kp)

    # Path 1: y is None -> softmax probabilities
    y_pred = jax.block_until_ready(net_forward(x, w1, b1, w2, b2))

    # Path 2: y given -> scalar cross-entropy loss (single fused kernel)
    loss = jax.block_until_ready(net_forward_with_loss(x, y, w1, b1, w2, b2))

    # Pure-JAX reference check (tolerance loosened slightly for the EUP
    # approximate reciprocal used in the softmax denominator)
    logits_ref = (x @ w1 + b1) @ w2 + b2
    probs_ref = jax.nn.softmax(logits_ref, axis=1)
    loss_ref = jnp.mean(
        jax.nn.logsumexp(probs_ref, axis=1) - probs_ref[jnp.arange(B), y]
    )
    assert y_pred.shape == (B, 4)
    assert np.allclose(np.asarray(y_pred), np.asarray(probs_ref),
                       atol=5e-3, rtol=5e-3), "forward mismatch"
    assert abs(float(loss) - float(loss_ref)) < 5e-3, "loss mismatch"
    assert bool(np.all(np.isfinite(np.asarray(y_pred))))

    print("KERNEL_OK")
</pallas_src>

<mosaic_0001>
module attributes {stable_mosaic.version = 11 : i64} {
  func.func @net_forward_kernel(%arg0: i32, %arg1: memref<8x2xf32, #tpu.memory_space<vmem>>, %arg2: memref<2x5xf32, #tpu.memory_space<vmem>>, %arg3: memref<1x5xf32, #tpu.memory_space<vmem>>, %arg4: memref<5x128xf32, #tpu.memory_space<vmem>>, %arg5: memref<1x128xf32, #tpu.memory_space<vmem>>, %arg6: memref<8x128xf32, #tpu.memory_space<vmem>>) attributes {dimension_semantics = [#tpu.dimension_semantics<parallel>], iteration_bounds = array<i64: 1>, scalar_prefetch = 0 : i64, scratch_operands = 0 : i64, tpu.core_type = #tpu.core_type<tc>, window_params = [{transform_indices = @transform_0, window_bounds = array<i64: 8, 2>}, {pipeline_mode = #tpu.pipeline_mode<synchronous>, transform_indices = @transform_1, window_bounds = array<i64: 2, 5>}, {pipeline_mode = #tpu.pipeline_mode<synchronous>, transform_indices = @transform_2, window_bounds = array<i64: 1, 5>}, {pipeline_mode = #tpu.pipeline_mode<synchronous>, transform_indices = @transform_3, window_bounds = array<i64: 5, 128>}, {pipeline_mode = #tpu.pipeline_mode<synchronous>, transform_indices = @transform_4, window_bounds = array<i64: 1, 128>}, {transform_indices = @transform_5, window_bounds = array<i64: 8, 128>}]} {
    %c0 = arith.constant 0 : index
    %c0_0 = arith.constant 0 : index
    %0 = vector.load %arg1[%c0, %c0_0] : memref<8x2xf32, #tpu.memory_space<vmem>>, vector<8x2xf32>
    %c0_1 = arith.constant 0 : index
    %c0_2 = arith.constant 0 : index
    %1 = vector.load %arg2[%c0_1, %c0_2] : memref<2x5xf32, #tpu.memory_space<vmem>>, vector<2x5xf32>
    %c0_3 = arith.constant 0 : index
    %c0_4 = arith.constant 0 : index
    %2 = vector.load %arg3[%c0_3, %c0_4] : memref<1x5xf32, #tpu.memory_space<vmem>>, vector<1x5xf32>
    %c0_5 = arith.constant 0 : index
    %c0_6 = arith.constant 0 : index
    %3 = vector.load %arg4[%c0_5, %c0_6] : memref<5x128xf32, #tpu.memory_space<vmem>>, vector<5x128xf32>
    %c0_7 = arith.constant 0 : index
    %c0_8 = arith.constant 0 : index
    %4 = vector.load %arg5[%c0_7, %c0_8] : memref<1x128xf32, #tpu.memory_space<vmem>>, vector<1x128xf32>
    %5 = vector.extract_strided_slice %0 {offsets = [0, 0], sizes = [8, 1], strides = [1, 1]} : vector<8x2xf32> to vector<8x1xf32>
    %6 = vector.extract_strided_slice %1 {offsets = [0, 0], sizes = [1, 5], strides = [1, 1]} : vector<2x5xf32> to vector<1x5xf32>
    %7 = vector.broadcast %5 : vector<8x1xf32> to vector<8x5xf32>
    %8 = vector.broadcast %6 : vector<1x5xf32> to vector<8x5xf32>
    %9 = arith.mulf %7, %8 : vector<8x5xf32>
    %10 = vector.broadcast %2 : vector<1x5xf32> to vector<8x5xf32>
    %11 = arith.addf %10, %9 : vector<8x5xf32>
    %12 = vector.extract_strided_slice %0 {offsets = [0, 1], sizes = [8, 1], strides = [1, 1]} : vector<8x2xf32> to vector<8x1xf32>
    %13 = vector.extract_strided_slice %1 {offsets = [1, 0], sizes = [1, 5], strides = [1, 1]} : vector<2x5xf32> to vector<1x5xf32>
    %14 = vector.broadcast %12 : vector<8x1xf32> to vector<8x5xf32>
    %15 = vector.broadcast %13 : vector<1x5xf32> to vector<8x5xf32>
    %16 = arith.mulf %14, %15 : vector<8x5xf32>
    %17 = arith.addf %11, %16 : vector<8x5xf32>
    %18 = vector.extract_strided_slice %17 {offsets = [0, 0], sizes = [8, 1], strides = [1, 1]} : vector<8x5xf32> to vector<8x1xf32>
    %19 = vector.extract_strided_slice %3 {offsets = [0, 0], sizes = [1, 128], strides = [1, 1]} : vector<5x128xf32> to vector<1x128xf32>
    %20 = vector.broadcast %18 : vector<8x1xf32> to vector<8x128xf32>
    %21 = vector.broadcast %19 : vector<1x128xf32> to vector<8x128xf32>
    %22 = arith.mulf %20, %21 : vector<8x128xf32>
    %23 = vector.broadcast %4 : vector<1x128xf32> to vector<8x128xf32>
    %24 = arith.addf %23, %22 : vector<8x128xf32>
    %25 = vector.extract_strided_slice %17 {offsets = [0, 1], sizes = [8, 1], strides = [1, 1]} : vector<8x5xf32> to vector<8x1xf32>
    %26 = vector.extract_strided_slice %3 {offsets = [1, 0], sizes = [1, 128], strides = [1, 1]} : vector<5x128xf32> to vector<1x128xf32>
    %27 = vector.broadcast %25 : vector<8x1xf32> to vector<8x128xf32>
    %28 = vector.broadcast %26 : vector<1x128xf32> to vector<8x128xf32>
    %29 = arith.mulf %27, %28 : vector<8x128xf32>
    %30 = arith.addf %24, %29 : vector<8x128xf32>
    %31 = vector.extract_strided_slice %17 {offsets = [0, 2], sizes = [8, 1], strides = [1, 1]} : vector<8x5xf32> to vector<8x1xf32>
    %32 = vector.extract_strided_slice %3 {offsets = [2, 0], sizes = [1, 128], strides = [1, 1]} : vector<5x128xf32> to vector<1x128xf32>
    %33 = vector.broadcast %31 : vector<8x1xf32> to vector<8x128xf32>
    %34 = vector.broadcast %32 : vector<1x128xf32> to vector<8x128xf32>
    %35 = arith.mulf %33, %34 : vector<8x128xf32>
    %36 = arith.addf %30, %35 : vector<8x128xf32>
    %37 = vector.extract_strided_slice %17 {offsets = [0, 3], sizes = [8, 1], strides = [1, 1]} : vector<8x5xf32> to vector<8x1xf32>
    %38 = vector.extract_strided_slice %3 {offsets = [3, 0], sizes = [1, 128], strides = [1, 1]} : vector<5x128xf32> to vector<1x128xf32>
    %39 = vector.broadcast %37 : vector<8x1xf32> to vector<8x128xf32>
    %40 = vector.broadcast %38 : vector<1x128xf32> to vector<8x128xf32>
    %41 = arith.mulf %39, %40 : vector<8x128xf32>
    %42 = arith.addf %36, %41 : vector<8x128xf32>
    %43 = vector.extract_strided_slice %17 {offsets = [0, 4], sizes = [8, 1], strides = [1, 1]} : vector<8x5xf32> to vector<8x1xf32>
    %44 = vector.extract_strided_slice %3 {offsets = [4, 0], sizes = [1, 128], strides = [1, 1]} : vector<5x128xf32> to vector<1x128xf32>
    %45 = vector.broadcast %43 : vector<8x1xf32> to vector<8x128xf32>
    %46 = vector.broadcast %44 : vector<1x128xf32> to vector<8x128xf32>
    %47 = arith.mulf %45, %46 : vector<8x128xf32>
    %48 = arith.addf %42, %47 : vector<8x128xf32>
    %cst = arith.constant dense<0xFF800000> : vector<8xf32>
    %49 = vector.multi_reduction <maximumf>, %48, %cst [1] : vector<8x128xf32> to vector<8xf32>
    %50 = vector.shape_cast %49 : vector<8xf32> to vector<8x1xf32>
    %51 = vector.broadcast %50 : vector<8x1xf32> to vector<8x128xf32>
    %52 = arith.subf %48, %51 : vector<8x128xf32>
    %53 = math.exp %52 : vector<8x128xf32>
    %cst_9 = arith.constant dense<0.000000e+00> : vector<8xf32>
    %54 = vector.multi_reduction <add>, %53, %cst_9 [1] : vector<8x128xf32> to vector<8xf32>
    %55 = vector.shape_cast %54 : vector<8xf32> to vector<8x1xf32>
    %56 = tpu.reciprocal %55 {approx = true} : vector<8x1xf32> -> vector<8x1xf32>
    %57 = vector.broadcast %56 : vector<8x1xf32> to vector<8x128xf32>
    %58 = arith.mulf %53, %57 : vector<8x128xf32>
    %c0_10 = arith.constant 0 : index
    %c0_11 = arith.constant 0 : index
    %59 = vector.load %arg6[%c0_10, %c0_11] : memref<8x128xf32, #tpu.memory_space<vmem>>, vector<8x128xf32>
    tpu.vector_store %arg6[%c0_10, %c0_11], %58 {strides = array<i32>} : memref<8x128xf32, #tpu.memory_space<vmem>>, vector<8x128xf32>,
    return
  }
  func.func @transform_0(%arg0: i32) -> (i32, i32) {
    %c0_i32 = arith.constant 0 : i32
    %c0_i32_0 = arith.constant 0 : i32
    return %arg0, %c0_i32 : i32, i32
  }
  func.func @transform_1(%arg0: i32) -> (i32, i32) {
    %c0_i32 = arith.constant 0 : i32
    %c0_i32_0 = arith.constant 0 : i32
    %c0_i32_1 = arith.constant 0 : i32
    return %c0_i32, %c0_i32_0 : i32, i32
  }
  func.func @transform_2(%arg0: i32) -> (i32, i32) {
    %c0_i32 = arith.constant 0 : i32
    %c0_i32_0 = arith.constant 0 : i32
    %c0_i32_1 = arith.constant 0 : i32
    return %c0_i32, %c0_i32_0 : i32, i32
  }
  func.func @transform_3(%arg0: i32) -> (i32, i32) {
    %c0_i32 = arith.constant 0 : i32
    %c0_i32_0 = arith.constant 0 : i32
    %c0_i32_1 = arith.constant 0 : i32
    return %c0_i32, %c0_i32_0 : i32, i32
  }
  func.func @transform_4(%arg0: i32) -> (i32, i32) {
    %c0_i32 = arith.constant 0 : i32
    %c0_i32_0 = arith.constant 0 : i32
    %c0_i32_1 = arith.constant 0 : i32
    return %c0_i32, %c0_i32_0 : i32, i32
  }
  func.func @transform_5(%arg0: i32) -> (i32, i32) {
    %c0_i32 = arith.constant 0 : i32
    %c0_i32_0 = arith.constant 0 : i32
    return %arg0, %c0_i32 : i32, i32
  }
}

</mosaic_0001>

<llo_original>
// kernel: tpu_custom_call.1
$region0: #{tpu_custom_call.1}
  #allocation0 [shape = 'u32[]', space=smem, size = 0x4, offset = 0x4, fixed_abs, tag = 'smem constant byte address 0x4 - core index']
  #allocation1 [shape = 'u32[144,128]{1,0:T(1,128)}', space=vmem, size = 0x12000, scoped, tag = 'internal scratch']
  %s0 = inlined_call_operand.vmem [shape: f32[8,2], index: 0, kind: input, shape index: {}]
  %s1 = inlined_call_operand.vmem [shape: f32[2,5], index: 1, kind: input, shape index: {}]
  %s2 = inlined_call_operand.vmem [shape: f32[1,5], index: 2, kind: input, shape index: {}]
  %s3 = inlined_call_operand.vmem [shape: f32[5,128], index: 3, kind: input, shape index: {}]
  %s4 = inlined_call_operand.vmem [shape: f32[1,128], index: 4, kind: input, shape index: {}]
  %s5 = inlined_call_operand.hbm [shape: f32[8,128], index: 5, kind: output, shape index: {}]
  %s6 = sld [smem:[#allocation0]]
  $region30: #{tpu_custom_call.1} parent=0
    _
  %s8 = ssub.s32 1, %s6
  %s9 = scalar_select 0, %s8, %s6
  $region1: #{tpu_custom_call.1} parent=0
    #allocation2 [shape = 'u8[4096]{0}', space=vmem, size = 0x1000, scoped, tag = 'output window, operand 0, single buffered']
    #allocation3 [shape = 's32[1]{0}', space=sflag, size = 0x4, scoped, tag = 'scoped memory for tpu_custom_call.1']
    %10 = vsyncpa [#allocation3], 0
    // Predicated region
    $region2: #{tpu_custom_call.1} parent=1 // pred_check
      _
    $region3: #{tpu_custom_call.1} parent=1 // pred_check_branch
      %12 = sbr.rel (0) target = $region5
    $region4: #{tpu_custom_call.1} parent=1 // pred_region
      _
    $region5: #{tpu_custom_call.1} parent=1 // pred_fallthru
      _
    // Predicated region
    $region6: #{tpu_custom_call.1} parent=1 // pred_check
      _
    $region7: #{tpu_custom_call.1} parent=1 // pred_check_branch
      %14 = sbr.rel (0) target = $region9
    $region8: #{tpu_custom_call.1} parent=1 // pred_region
      _
    $region9: #{tpu_custom_call.1} parent=1 // pred_fallthru
      _
    // Predicated region
    $region10: #{tpu_custom_call.1} parent=1 // pred_check
      _
    $region11: #{tpu_custom_call.1} parent=1 // pred_check_branch
      %16 = sbr.rel (0) target = $region13
    $region12: #{tpu_custom_call.1} parent=1 // pred_region
      _
    $region13: #{tpu_custom_call.1} parent=1 // pred_fallthru
      _
    // Predicated region
    $region14: #{tpu_custom_call.1} parent=1 // pred_check
      _
    $region15: #{tpu_custom_call.1} parent=1 // pred_check_branch
      %18 = sbr.rel (0) target = $region17
    $region16: #{tpu_custom_call.1} parent=1 // pred_region
      _
    $region17: #{tpu_custom_call.1} parent=1 // pred_fallthru
      _
    // Predicated region
    $region18: #{tpu_custom_call.1} parent=1 // pred_check
      _
    $region19: #{tpu_custom_call.1} parent=1 // pred_check_branch
      %20 = sbr.rel (0) target = $region21
    $region20: #{tpu_custom_call.1} parent=1 // pred_region
      _
    $region21: #{tpu_custom_call.1} parent=1 // pred_fallthru
      _
    %v21 = vld [vmem:[%s0] sm:$0xff]
    %v22 = vld [vmem:[%s1] sm:$0x3]
    %v23 = vld [vmem:[%s2] sm:$0x1]
    %v24 = vld [vmem:[%s3] sm:$0x1f]
    %v25 = vld [vmem:[%s4] sm:$0x1]
    %27 = vset.pattern.permute.xlu0 0
    %28 = vperm.xlu0 %27, %v21
    %v29 = vpop.permute.xlu0 %28
    %v31 = vlaneseq
    %v32 = vshrl.u32 %v31, 7
    %v33 = vsub.s32 0, %v32
    %v34 = vrot.slane %v22, %v33
    %v35 = vmul.f32 %v29, %v34
    %v37 = vlaneseq
    %v38 = vshrl.u32 %v37, 7
    %v39 = vsub.s32 0, %v38
    %v40 = vrot.slane %v23, %v39
    %v42 = vadd.f32 %v40, %v35
    %43 = vset.pattern.permute.xlu0 1
    %44 = vperm.xlu0 %43, %v21
    %v45 = vpop.permute.xlu0 %44
    %v47 = vlaneseq
    %v48 = vshrl.u32 %v47, 7
    %v49 = vsub.s32 1, %v48
    %v50 = vrot.slane %v22, %v49
    %v51 = vmul.f32 %v45, %v50
    %v52 = vadd.f32 %v42, %v51
    %54 = vset.pattern.permute.xlu0 0
    %55 = vperm.xlu0 %54, %v52
    %v56 = vpop.permute.xlu0 %55
    %v58 = vlaneseq
    %v59 = vshrl.u32 %v58, 7
    %v60 = vsub.s32 0, %v59
    %v61 = vrot.slane %v24, %v60
    %v62 = vmul.f32 %v56, %v61
    %v64 = vlaneseq
    %v65 = vshrl.u32 %v64, 7
    %v66 = vsub.s32 0, %v65
    %v67 = vrot.slane %v25, %v66
    %v69 = vadd.f32 %v67, %v62
    %70 = vset.pattern.permute.xlu0 1
    %71 = vperm.xlu0 %70, %v52
    %v72 = vpop.permute.xlu0 %71
    %v74 = vlaneseq
    %v75 = vshrl.u32 %v74, 7
    %v76 = vsub.s32 1, %v75
    %v77 = vrot.slane %v24, %v76
    %v78 = vmul.f32 %v72, %v77
    %v79 = vadd.f32 %v69, %v78
    %80 = vset.pattern.permute.xlu0 2
    %81 = vperm.xlu0 %80, %v52
    %v82 = vpop.permute.xlu0 %81
    %v84 = vlaneseq
    %v85 = vshrl.u32 %v84, 7
    %v86 = vsub.s32 2, %v85
    %v87 = vrot.slane %v24, %v86
    %v88 = vmul.f32 %v82, %v87
    %v89 = vadd.f32 %v79, %v88
    %90 = vset.pattern.permute.xlu0 3
    %91 = vperm.xlu0 %90, %v52
    %v92 = vpop.permute.xlu0 %91
    %v94 = vlaneseq
    %v95 = vshrl.u32 %v94, 7
    %v96 = vsub.s32 3, %v95
    %v97 = vrot.slane %v24, %v96
    %v98 = vmul.f32 %v92, %v97
    %v99 = vadd.f32 %v89, %v98
    %100 = vset.pattern.permute.xlu0 4
    %101 = vperm.xlu0 %100, %v52
    %v102 = vpop.permute.xlu0 %101
    %v104 = vlaneseq
    %v105 = vshrl.u32 %v104, 7
    %v106 = vsub.s32 4, %v105
    %v107 = vrot.slane %v24, %v106
    %v108 = vmul.f32 %v102, %v107
    %v109 = vadd.f32 %v99, %v108
    %110 = vmax.xlane.f32.xlu0 %v109
    %v111 = vpop.xlane.xlu0 %110
    %v112 = vsub.f32 %v109, %v111
    %v113 = vmul.f32 %v112, 1.442695
    %v114 = vpow.pop %v113
    %115 = vadd.xlane.f32.xlu0 %v114
    %v116 = vpop.xlane.xlu0 %115
    %v117 = vrcp.pop %v116
    %v118 = vmul.f32 %v114, %v117
    %119 = vst [vmem:[#allocation2] sm:$0xff] %v118
    // Predicated region
    $region22: #{tpu_custom_call.1} parent=1 // pred_check
      _
    $region23: #{tpu_custom_call.1} parent=1 // pred_check_branch
      %121 = sbr.rel (0) target = $region25
    $region24: #{tpu_custom_call.1} parent=1 // pred_region
      %s123 = ssub.s32 128, 128
      %124 = vsyncadd [#allocation3], %s123
      %s126 = sshll.u32 [#allocation2], 4
      %s127 = int_to_ptr.vmem [resolvable:$true] %s126
      %129 = dma.vmem_to_hbm [thread:$0]  %s127, 128, %s5, [#allocation3]
    $region25: #{tpu_custom_call.1} parent=1 // pred_fallthru
      _
    // Predicated region
    $region26: #{tpu_custom_call.1} parent=1 // pred_check
      _
    $region27: #{tpu_custom_call.1} parent=1 // pred_check_branch
      %131 = sbr.rel (0) target = $region29
    $region28: #{tpu_custom_call.1} parent=1 // pred_region
      %132 = dma.done [#allocation3], 128
    $region29: #{tpu_custom_call.1} parent=1 // pred_fallthru
      _
    %133 = vsyncpa [#allocation3], 1

</llo_original>
